<compile_context>
chip_gen: v5e
topology: v5e:2x2
jax: 0.10.0
libtpu: 0.0.40
codegen_flags: <defaults>
</compile_context>

<pallas_src>
import jax
import jax.numpy as jnp
from jax.experimental import pallas as pl
from jax.experimental.pallas import tpu as pltpu

IN_DIM = 512
HID_DIM = 512
OUT_DIM = 3
OUT_PAD = 128    # lane-dense padded output width (exact fit for v5e 128-wide MXU)
MAX_TB = 1024    # batch tile (rows per grid step); multiple of 128, VMEM-safe everywhere


def discriminator_kernel(x_ref, w1_ref, b1_ref, w2_ref, b2_ref, o_ref):
    # GRL forward = identity; Dropout(0.5) = identity in eval mode.
    # x arrives already bf16 (cast in the wrapper -> halved HBM DMA).
    h = jnp.dot(x_ref[...], w1_ref[...], preferred_element_type=jnp.float32)
    h = h + b1_ref[...]                       # f32 bias add (VPU slack)
    h = jnp.maximum(h, 0.0)                   # ReLU
    out = jnp.dot(h.astype(jnp.bfloat16), w2_ref[...],
                  preferred_element_type=jnp.float32)
    out = out + b2_ref[...]
    o_ref[...] = out.astype(o_ref.dtype)      # bf16 lane-dense store


def prepare_params(w1_t, b1, w2_t, b2):
    """One-time parameter prep (hoisted out of the forward pass):
       - cast weights to bf16 (halves weight DMA, matches MXU bf16 datapath)
       - pre-pad fc2 weight/bias from 3 -> 128 output columns (lane-dense stores)
       - reshape b1 to a broadcastable row."""
    w1_bf = w1_t.astype(jnp.bfloat16)
    b1_row = b1.reshape(1, HID_DIM).astype(jnp.float32)
    w2_pad = (jnp.zeros((HID_DIM, OUT_PAD), dtype=jnp.bfloat16)
              .at[:, :OUT_DIM].set(w2_t.astype(jnp.bfloat16)))
    b2_pad = (jnp.zeros((1, OUT_PAD), dtype=jnp.float32)
              .at[:, :OUT_DIM].set(b2.astype(jnp.float32)))
    return w1_bf, b1_row, w2_pad, b2_pad


def _pick_batch_tile(B):
    """Batch tile: full batch when tiny; otherwise 128-aligned, capped at MAX_TB,
    and sized so the grid has >= 2 steps (lets v7x shard across its 2 TCs)."""
    if B <= 128:
        return B
    tb = 128 * pl.cdiv(B, 2 * 128)   # ~half the batch, rounded up to 128
    return min(tb, MAX_TB)


@jax.jit
def discriminator_forward(x, w1_bf, b1_row, w2_pad, b2_pad):
    """x: [B, 512] float32 (or bf16). Returns [B, 3] float32 logits."""
    B = x.shape[0]
    assert x.shape[1] == IN_DIM

    # Cast at the producer: the kernel DMAs bf16 activations (dominant traffic).
    xb = x.astype(jnp.bfloat16)

    tb = _pick_batch_tile(B)
    grid = (pl.cdiv(B, tb),)

    # Advisory cost hint so XLA overlaps this small custom call with neighbors.
    cost = pl.CostEstimate(
        flops=2 * B * IN_DIM * HID_DIM + 2 * B * HID_DIM * OUT_PAD,
        transcendentals=0,
        bytes_accessed=(B * IN_DIM * 2            # x (bf16)
                        + B * OUT_PAD * 2         # padded out (bf16)
                        + IN_DIM * HID_DIM * 2    # w1 (bf16)
                        + HID_DIM * OUT_PAD * 2   # w2 padded (bf16)
                        + HID_DIM * 4 + OUT_PAD * 4),  # biases (f32)
    )

    out_padded = pl.pallas_call(
        discriminator_kernel,
        out_shape=jax.ShapeDtypeStruct((B, OUT_PAD), jnp.bfloat16),
        grid=grid,
        in_specs=[
            pl.BlockSpec((tb, IN_DIM), lambda i: (i, 0)),        # x: tiled over batch
            pl.BlockSpec((IN_DIM, HID_DIM), lambda i: (0, 0)),   # w1: resident
            pl.BlockSpec((1, HID_DIM), lambda i: (0, 0)),        # b1: resident
            pl.BlockSpec((HID_DIM, OUT_PAD), lambda i: (0, 0)),  # w2 (padded): resident
            pl.BlockSpec((1, OUT_PAD), lambda i: (0, 0)),        # b2 (padded): resident
        ],
        out_specs=pl.BlockSpec((tb, OUT_PAD), lambda i: (i, 0)),
        compiler_params=pltpu.CompilerParams(
            dimension_semantics=("parallel",),
        ),
        cost_estimate=cost,
    )(xb, w1_bf, b1_row, w2_pad, b2_pad)

    # Slice back to the 3 real logits; fused inside this jit.
    # (Callers that can consume padded bf16 logits may use out_padded directly.)
    return out_padded[:, :OUT_DIM].astype(jnp.float32)


def init_params(key):
    """Deterministic init matching the PyTorch module:
       fc1.weight ~ N(0, 0.01), fc1.bias = 0
       fc2.weight ~ N(0, 0.3),  fc2.bias = 0
       Weights stored transposed: [in, out]."""
    k1, k2 = jax.random.split(key)
    w1_t = jax.random.normal(k1, (IN_DIM, HID_DIM), dtype=jnp.float32) * 0.01
    b1 = jnp.zeros((HID_DIM,), dtype=jnp.float32)
    w2_t = jax.random.normal(k2, (HID_DIM, OUT_DIM), dtype=jnp.float32) * 0.3
    b2 = jnp.zeros((OUT_DIM,), dtype=jnp.float32)
    return w1_t, b1, w2_t, b2


def reference_forward(x, w1_t, b1, w2_t, b2):
    """Plain-JAX reference using the same bf16-input/weight, f32-accumulate recipe
    (output kept in f32; kernel additionally rounds the store to bf16)."""
    xb = x.astype(jnp.bfloat16)
    h = jnp.dot(xb, w1_t.astype(jnp.bfloat16),
                preferred_element_type=jnp.float32) + b1
    h = jnp.maximum(h, 0.0)
    out = jnp.dot(h.astype(jnp.bfloat16), w2_t.astype(jnp.bfloat16),
                  preferred_element_type=jnp.float32) + b2
    return out


if __name__ == "__main__":
    key = jax.random.PRNGKey(0)
    k_param, k_x = jax.random.split(key)

    w1_t, b1, w2_t, b2 = init_params(k_param)
    params = prepare_params(w1_t, b1, w2_t, b2)   # one-time: bf16 cast + fc2 padding

    B = 8  # small batch
    x = jax.random.normal(k_x, (B, IN_DIM), dtype=jnp.float32)

    out = discriminator_forward(x, *params)
    out = jax.block_until_ready(out)

    # sanity check vs plain-JAX reference (bf16 weights/inputs + bf16 output
    # store -> loosened tolerance)
    ref = reference_forward(x, w1_t, b1, w2_t, b2)
    assert out.shape == (B, OUT_DIM)
    assert jnp.allclose(out, ref, atol=5e-2, rtol=5e-2), (
        f"max abs err {jnp.max(jnp.abs(out - ref))}")

    print("KERNEL_OK")
</pallas_src>

<mosaic_0001>
module attributes {stable_mosaic.version = 11 : i64} {
  func.func @discriminator_kernel(%arg0: i32, %arg1: memref<8x512xbf16, #tpu.memory_space<vmem>>, %arg2: memref<512x512xbf16, #tpu.memory_space<vmem>>, %arg3: memref<1x512xf32, #tpu.memory_space<vmem>>, %arg4: memref<512x128xbf16, #tpu.memory_space<vmem>>, %arg5: memref<1x128xf32, #tpu.memory_space<vmem>>, %arg6: memref<8x128xbf16, #tpu.memory_space<vmem>>) attributes {dimension_semantics = [#tpu.dimension_semantics<parallel>], iteration_bounds = array<i64: 1>, scalar_prefetch = 0 : i64, scratch_operands = 0 : i64, tpu.core_type = #tpu.core_type<tc>, window_params = [{transform_indices = @transform_0, window_bounds = array<i64: 8, 512>}, {pipeline_mode = #tpu.pipeline_mode<synchronous>, transform_indices = @transform_1, window_bounds = array<i64: 512, 512>}, {pipeline_mode = #tpu.pipeline_mode<synchronous>, transform_indices = @transform_2, window_bounds = array<i64: 1, 512>}, {pipeline_mode = #tpu.pipeline_mode<synchronous>, transform_indices = @transform_3, window_bounds = array<i64: 512, 128>}, {pipeline_mode = #tpu.pipeline_mode<synchronous>, transform_indices = @transform_4, window_bounds = array<i64: 1, 128>}, {transform_indices = @transform_5, window_bounds = array<i64: 8, 128>}]} {
    %c0 = arith.constant 0 : index
    %c0_0 = arith.constant 0 : index
    %0 = vector.load %arg1[%c0, %c0_0] : memref<8x512xbf16, #tpu.memory_space<vmem>>, vector<8x512xbf16>
    %c0_1 = arith.constant 0 : index
    %c0_2 = arith.constant 0 : index
    %1 = vector.load %arg2[%c0_1, %c0_2] : memref<512x512xbf16, #tpu.memory_space<vmem>>, vector<512x512xbf16>
    %cst = arith.constant dense<0.000000e+00> : vector<8x512xf32>
    %2 = tpu.matmul %0, %1, %cst {dimension_numbers = #tpu.dot_dimension_numbers<[1], [0], [0], [1], [0, 0, 1, 1], [], []>} : vector<8x512xbf16>, vector<512x512xbf16>, vector<8x512xf32> -> vector<8x512xf32>
    %c0_3 = arith.constant 0 : index
    %c0_4 = arith.constant 0 : index
    %3 = vector.load %arg3[%c0_3, %c0_4] : memref<1x512xf32, #tpu.memory_space<vmem>>, vector<1x512xf32>
    %4 = vector.broadcast %3 : vector<1x512xf32> to vector<8x512xf32>
    %5 = arith.addf %2, %4 : vector<8x512xf32>
    %cst_5 = arith.constant 0.000000e+00 : f32
    %6 = vector.broadcast %cst_5 : f32 to vector<8x512xf32>
    %7 = arith.maximumf %5, %6 : vector<8x512xf32>
    %8 = arith.truncf %7 : vector<8x512xf32> to vector<8x512xbf16>
    %c0_6 = arith.constant 0 : index
    %c0_7 = arith.constant 0 : index
    %9 = vector.load %arg4[%c0_6, %c0_7] : memref<512x128xbf16, #tpu.memory_space<vmem>>, vector<512x128xbf16>
    %cst_8 = arith.constant dense<0.000000e+00> : vector<8x128xf32>
    %10 = tpu.matmul %8, %9, %cst_8 {dimension_numbers = #tpu.dot_dimension_numbers<[1], [0], [0], [1], [0, 0, 1, 1], [], []>} : vector<8x512xbf16>, vector<512x128xbf16>, vector<8x128xf32> -> vector<8x128xf32>
    %c0_9 = arith.constant 0 : index
    %c0_10 = arith.constant 0 : index
    %11 = vector.load %arg5[%c0_9, %c0_10] : memref<1x128xf32, #tpu.memory_space<vmem>>, vector<1x128xf32>
    %12 = vector.broadcast %11 : vector<1x128xf32> to vector<8x128xf32>
    %13 = arith.addf %10, %12 : vector<8x128xf32>
    %14 = arith.truncf %13 : vector<8x128xf32> to vector<8x128xbf16>
    %c0_11 = arith.constant 0 : index
    %c0_12 = arith.constant 0 : index
    %15 = vector.load %arg6[%c0_11, %c0_12] : memref<8x128xbf16, #tpu.memory_space<vmem>>, vector<8x128xbf16>
    tpu.vector_store %arg6[%c0_11, %c0_12], %14 {strides = array<i32>} : memref<8x128xbf16, #tpu.memory_space<vmem>>, vector<8x128xbf16>,
    return
  }
  func.func @transform_0(%arg0: i32) -> (i32, i32) {
    %c0_i32 = arith.constant 0 : i32
    %c0_i32_0 = arith.constant 0 : i32
    return %arg0, %c0_i32 : i32, i32
  }
  func.func @transform_1(%arg0: i32) -> (i32, i32) {
    %c0_i32 = arith.constant 0 : i32
    %c0_i32_0 = arith.constant 0 : i32
    %c0_i32_1 = arith.constant 0 : i32
    return %c0_i32, %c0_i32_0 : i32, i32
  }
  func.func @transform_2(%arg0: i32) -> (i32, i32) {
    %c0_i32 = arith.constant 0 : i32
    %c0_i32_0 = arith.constant 0 : i32
    %c0_i32_1 = arith.constant 0 : i32
    return %c0_i32, %c0_i32_0 : i32, i32
  }
  func.func @transform_3(%arg0: i32) -> (i32, i32) {
    %c0_i32 = arith.constant 0 : i32
    %c0_i32_0 = arith.constant 0 : i32
    %c0_i32_1 = arith.constant 0 : i32
    return %c0_i32, %c0_i32_0 : i32, i32
  }
  func.func @transform_4(%arg0: i32) -> (i32, i32) {
    %c0_i32 = arith.constant 0 : i32
    %c0_i32_0 = arith.constant 0 : i32
    %c0_i32_1 = arith.constant 0 : i32
    return %c0_i32, %c0_i32_0 : i32, i32
  }
  func.func @transform_5(%arg0: i32) -> (i32, i32) {
    %c0_i32 = arith.constant 0 : i32
    %c0_i32_0 = arith.constant 0 : i32
    return %arg0, %c0_i32 : i32, i32
  }
}

</mosaic_0001>

<llo_original>
// kernel: discriminator_forward.1
$region0: #{discriminator_forward.1}
  #allocation0 [shape = 'u32[]', space=smem, size = 0x4, offset = 0x4, fixed_abs, tag = 'smem constant byte address 0x4 - core index']
  #allocation1 [shape = 'u32[72,128]{1,0:T(1,128)}', space=vmem, size = 0x9000, scoped, tag = 'internal scratch']
  %s0 = inlined_call_operand.vmem [shape: bf16[8,512], index: 0, kind: input, shape index: {}]
  %s1 = inlined_call_operand.hbm [shape: bf16[512,512], index: 1, kind: input, shape index: {}]
  %s2 = inlined_call_operand.vmem [shape: f32[1,512], index: 2, kind: input, shape index: {}]
  %s3 = inlined_call_operand.hbm [shape: bf16[512,128], index: 3, kind: input, shape index: {}]
  %s4 = inlined_call_operand.vmem [shape: f32[1,128], index: 4, kind: input, shape index: {}]
  %s5 = inlined_call_operand.vmem [shape: bf16[8,128], index: 5, kind: output, shape index: {}]
  %s6 = sld [smem:[#allocation0]]
  $region38: #{discriminator_forward.1} parent=0
    _
  %s8 = ssub.s32 1, %s6
  %s9 = scalar_select 0, %s8, %s6
  $region1: #{discriminator_forward.1} parent=0
    #allocation2 [shape = 'u8[524288]{0}', space=vmem, size = 0x80000, scoped, tag = 'input window, operand 1, single buffered']
    #allocation3 [shape = 's32[1]{0}', space=sflag, size = 0x4, scoped, tag = 'scoped memory for discriminator_forward.1']
    #allocation4 [shape = 'u8[131072]{0}', space=vmem, size = 0x20000, scoped, tag = 'input window, operand 3, single buffered']
    #allocation5 [shape = 's32[1]{0}', space=sflag, size = 0x4, scoped, tag = 'scoped memory for discriminator_forward.1']
    %10 = vsyncpa [#allocation3], 0
    %11 = vsyncpa [#allocation5], 0
    // Predicated region
    $region2: #{discriminator_forward.1} parent=1 // pred_check
      _
    $region3: #{discriminator_forward.1} parent=1 // pred_check_branch
      %13 = sbr.rel (0) target = $region5
    $region4: #{discriminator_forward.1} parent=1 // pred_region
      _
    $region5: #{discriminator_forward.1} parent=1 // pred_fallthru
      _
    // Predicated region
    $region6: #{discriminator_forward.1} parent=1 // pred_check
      _
    $region7: #{discriminator_forward.1} parent=1 // pred_check_branch
      %15 = sbr.rel (0) target = $region9
    $region8: #{discriminator_forward.1} parent=1 // pred_region
      %17 = vsyncadd [#allocation3], 0
      %s18 = sshll.u32 %s1, 4
      %s19 = int_to_ptr.hbm [resolvable:$true] %s18
      %s20 = sshll.u32 [#allocation2], 4
      %s21 = int_to_ptr.vmem [resolvable:$true] %s20
      %26 = dma.hbm_to_vmem [thread:$0]  %s19, 16384, %s21, [#allocation3], 256, 256, 16
    $region9: #{discriminator_forward.1} parent=1 // pred_fallthru
      _
    // Predicated region
    $region10: #{discriminator_forward.1} parent=1 // pred_check
      _
    $region11: #{discriminator_forward.1} parent=1 // pred_check_branch
      %28 = sbr.rel (0) target = $region13
    $region12: #{discriminator_forward.1} parent=1 // pred_region
      _
    $region13: #{discriminator_forward.1} parent=1 // pred_fallthru
      _
    // Predicated region
    $region14: #{discriminator_forward.1} parent=1 // pred_check
      _
    $region15: #{discriminator_forward.1} parent=1 // pred_check_branch
      %30 = sbr.rel (0) target = $region17
    $region16: #{discriminator_forward.1} parent=1 // pred_region
      %32 = vsyncadd [#allocation5], 0
      %s33 = sshll.u32 %s3, 4
      %s34 = int_to_ptr.hbm [resolvable:$true] %s33
      %s35 = sshll.u32 [#allocation4], 4
      %s36 = int_to_ptr.vmem [resolvable:$true] %s35
      %41 = dma.hbm_to_vmem [thread:$0]  %s34, 4096, %s36, [#allocation5], 64, 64, 4
    $region17: #{discriminator_forward.1} parent=1 // pred_fallthru
      _
    // Predicated region
    $region18: #{discriminator_forward.1} parent=1 // pred_check
      _
    $region19: #{discriminator_forward.1} parent=1 // pred_check_branch
      %43 = sbr.rel (0) target = $region21
    $region20: #{discriminator_forward.1} parent=1 // pred_region
      _
    $region21: #{discriminator_forward.1} parent=1 // pred_fallthru
      _
    // Predicated region
    $region22: #{discriminator_forward.1} parent=1 // pred_check
      _
    $region23: #{discriminator_forward.1} parent=1 // pred_check_branch
      %45 = sbr.rel (0) target = $region25
    $region24: #{discriminator_forward.1} parent=1 // pred_region
      %47 = dma.done [#allocation3], 16384
    $region25: #{discriminator_forward.1} parent=1 // pred_fallthru
      _
    // Predicated region
    $region26: #{discriminator_forward.1} parent=1 // pred_check
      _
    $region27: #{discriminator_forward.1} parent=1 // pred_check_branch
      %49 = sbr.rel (0) target = $region29
    $region28: #{discriminator_forward.1} parent=1 // pred_region
      %51 = dma.done [#allocation5], 4096
    $region29: #{discriminator_forward.1} parent=1 // pred_fallthru
      _
    %v52 = vld [vmem:[%s0] sm:$0xff]
    %v53 = vld [vmem:[%s0 + $0x8] sm:$0xff]
    %v54 = vld [vmem:[#allocation2] sm:$0xff]
    %v55 = vld [vmem:[#allocation2 + $0x8] sm:$0xff]
    %v56 = vld [vmem:[#allocation2 + $0x10] sm:$0xff]
    %v57 = vld [vmem:[#allocation2 + $0x18] sm:$0xff]
    %v58 = vld [vmem:[#allocation2 + $0x20] sm:$0xff]
    %v59 = vld [vmem:[#allocation2 + $0x28] sm:$0xff]
    %v60 = vld [vmem:[#allocation2 + $0x30] sm:$0xff]
    %v61 = vld [vmem:[#allocation2 + $0x38] sm:$0xff]
    %v62 = vld [vmem:[#allocation2 + $0x40] sm:$0xff]
    %v63 = vld [vmem:[#allocation2 + $0x48] sm:$0xff]
    %v64 = vld [vmem:[#allocation2 + $0x50] sm:$0xff]
    %v65 = vld [vmem:[#allocation2 + $0x58] sm:$0xff]
    %v66 = vld [vmem:[#allocation2 + $0x60] sm:$0xff]
    %v67 = vld [vmem:[#allocation2 + $0x68] sm:$0xff]
    %v68 = vld [vmem:[#allocation2 + $0x70] sm:$0xff]
    %v69 = vld [vmem:[#allocation2 + $0x78] sm:$0xff]
    %v70 = vld [vmem:[#allocation2 + $0x80] sm:$0xff]
    %v71 = vld [vmem:[#allocation2 + $0x88] sm:$0xff]
    %v72 = vld [vmem:[#allocation2 + $0x90] sm:$0xff]
    %v73 = vld [vmem:[#allocation2 + $0x98] sm:$0xff]
    %v74 = vld [vmem:[#allocation2 + $0xa0] sm:$0xff]
    %v75 = vld [vmem:[#allocation2 + $0xa8] sm:$0xff]
    %v76 = vld [vmem:[#allocation2 + $0xb0] sm:$0xff]
    %v77 = vld [vmem:[#allocation2 + $0xb8] sm:$0xff]
    %v78 = vld [vmem:[#allocation2 + $0xc0] sm:$0xff]
    %v79 = vld [vmem:[#allocation2 + $0xc8] sm:$0xff]
    %v80 = vld [vmem:[#allocation2 + $0xd0] sm:$0xff]
    %v81 = vld [vmem:[#allocation2 + $0xd8] sm:$0xff]
    %v82 = vld [vmem:[#allocation2 + $0xe0] sm:$0xff]
    %v83 = vld [vmem:[#allocation2 + $0xe8] sm:$0xff]
    %v84 = vld [vmem:[#allocation2 + $0xf0] sm:$0xff]
    %v85 = vld [vmem:[#allocation2 + $0xf8] sm:$0xff]
    %v86 = vld [vmem:[#allocation2 + $0x100] sm:$0xff]
    %v87 = vld [vmem:[#allocation2 + $0x108] sm:$0xff]
    %v88 = vld [vmem:[#allocation2 + $0x110] sm:$0xff]
    %v89 = vld [vmem:[#allocation2 + $0x118] sm:$0xff]
    %v90 = vld [vmem:[#allocation2 + $0x120] sm:$0xff]
    %v91 = vld [vmem:[#allocation2 + $0x128] sm:$0xff]
    %v92 = vld [vmem:[#allocation2 + $0x130] sm:$0xff]
    %v93 = vld [vmem:[#allocation2 + $0x138] sm:$0xff]
    %v94 = vld [vmem:[#allocation2 + $0x140] sm:$0xff]
    %v95 = vld [vmem:[#allocation2 + $0x148] sm:$0xff]
    %v96 = vld [vmem:[#allocation2 + $0x150] sm:$0xff]
    %v97 = vld [vmem:[#allocation2 + $0x158] sm:$0xff]
    %v98 = vld [vmem:[#allocation2 + $0x160] sm:$0xff]
    %v99 = vld [vmem:[#allocation2 + $0x168] sm:$0xff]
    %v100 = vld [vmem:[#allocation2 + $0x170] sm:$0xff]
    %v101 = vld [vmem:[#allocation2 + $0x178] sm:$0xff]
    %v102 = vld [vmem:[#allocation2 + $0x180] sm:$0xff]
    %v103 = vld [vmem:[#allocation2 + $0x188] sm:$0xff]
    %v104 = vld [vmem:[#allocation2 + $0x190] sm:$0xff]
    %v105 = vld [vmem:[#allocation2 + $0x198] sm:$0xff]
    %v106 = vld [vmem:[#allocation2 + $0x1a0] sm:$0xff]
    %v107 = vld [vmem:[#allocation2 + $0x1a8] sm:$0xff]
    %v108 = vld [vmem:[#allocation2 + $0x1b0] sm:$0xff]
    %v109 = vld [vmem:[#allocation2 + $0x1b8] sm:$0xff]
    %v110 = vld [vmem:[#allocation2 + $0x1c0] sm:$0xff]
    %v111 = vld [vmem:[#allocation2 + $0x1c8] sm:$0xff]
    %v112 = vld [vmem:[#allocation2 + $0x1d0] sm:$0xff]
    %v113 = vld [vmem:[#allocation2 + $0x1d8] sm:$0xff]
    %v114 = vld [vmem:[#allocation2 + $0x1e0] sm:$0xff]
    %v115 = vld [vmem:[#allocation2 + $0x1e8] sm:$0xff]
    %v116 = vld [vmem:[#allocation2 + $0x1f0] sm:$0xff]
    %v117 = vld [vmem:[#allocation2 + $0x1f8] sm:$0xff]
    %v118 = vld [vmem:[#allocation2 + $0x200] sm:$0xff]
    %v119 = vld [vmem:[#allocation2 + $0x208] sm:$0xff]
    %v120 = vld [vmem:[#allocation2 + $0x210] sm:$0xff]
    %v121 = vld [vmem:[#allocation2 + $0x218] sm:$0xff]
    %v122 = vld [vmem:[#allocation2 + $0x220] sm:$0xff]
    %v123 = vld [vmem:[#allocation2 + $0x228] sm:$0xff]
    %v124 = vld [vmem:[#allocation2 + $0x230] sm:$0xff]
    %v125 = vld [vmem:[#allocation2 + $0x238] sm:$0xff]
    %v126 = vld [vmem:[#allocation2 + $0x240] sm:$0xff]
    %v127 = vld [vmem:[#allocation2 + $0x248] sm:$0xff]
    %v128 = vld [vmem:[#allocation2 + $0x250] sm:$0xff]
    %v129 = vld [vmem:[#allocation2 + $0x258] sm:$0xff]
    %v130 = vld [vmem:[#allocation2 + $0x260] sm:$0xff]
    %v131 = vld [vmem:[#allocation2 + $0x268] sm:$0xff]
    %v132 = vld [vmem:[#allocation2 + $0x270] sm:$0xff]
    %v133 = vld [vmem:[#allocation2 + $0x278] sm:$0xff]
    %v134 = vld [vmem:[#allocation2 + $0x280] sm:$0xff]
    %v135 = vld [vmem:[#allocation2 + $0x288] sm:$0xff]
    %v136 = vld [vmem:[#allocation2 + $0x290] sm:$0xff]
    %v137 = vld [vmem:[#allocation2 + $0x298] sm:$0xff]
    %v138 = vld [vmem:[#allocation2 + $0x2a0] sm:$0xff]
    %v139 = vld [vmem:[#allocation2 + $0x2a8] sm:$0xff]
    %v140 = vld [vmem:[#allocation2 + $0x2b0] sm:$0xff]
    %v141 = vld [vmem:[#allocation2 + $0x2b8] sm:$0xff]
    %v142 = vld [vmem:[#allocation2 + $0x2c0] sm:$0xff]
    %v143 = vld [vmem:[#allocation2 + $0x2c8] sm:$0xff]
    %v144 = vld [vmem:[#allocation2 + $0x2d0] sm:$0xff]
    %v145 = vld [vmem:[#allocation2 + $0x2d8] sm:$0xff]
    %v146 = vld [vmem:[#allocation2 + $0x2e0] sm:$0xff]
    %v147 = vld [vmem:[#allocation2 + $0x2e8] sm:$0xff]
    %v148 = vld [vmem:[#allocation2 + $0x2f0] sm:$0xff]
    %v149 = vld [vmem:[#allocation2 + $0x2f8] sm:$0xff]
    %v150 = vld [vmem:[#allocation2 + $0x300] sm:$0xff]
    %v151 = vld [vmem:[#allocation2 + $0x308] sm:$0xff]
    %v152 = vld [vmem:[#allocation2 + $0x310] sm:$0xff]
    %v153 = vld [vmem:[#allocation2 + $0x318] sm:$0xff]
    %v154 = vld [vmem:[#allocation2 + $0x320] sm:$0xff]
    %v155 = vld [vmem:[#allocation2 + $0x328] sm:$0xff]
    %v156 = vld [vmem:[#allocation2 + $0x330] sm:$0xff]
    %v157 = vld [vmem:[#allocation2 + $0x338] sm:$0xff]
    %v158 = vld [vmem:[#allocation2 + $0x340] sm:$0xff]
    %v159 = vld [vmem:[#allocation2 + $0x348] sm:$0xff]
    %v160 = vld [vmem:[#allocation2 + $0x350] sm:$0xff]
    %v161 = vld [vmem:[#allocation2 + $0x358] sm:$0xff]
    %v162 = vld [vmem:[#allocation2 + $0x360] sm:$0xff]
    %v163 = vld [vmem:[#allocation2 + $0x368] sm:$0xff]
    %v164 = vld [vmem:[#allocation2 + $0x370] sm:$0xff]
    %v165 = vld [vmem:[#allocation2 + $0x378] sm:$0xff]
    %v166 = vld [vmem:[#allocation2 + $0x380] sm:$0xff]
    %v167 = vld [vmem:[#allocation2 + $0x388] sm:$0xff]
    %v168 = vld [vmem:[#allocation2 + $0x390] sm:$0xff]
    %v169 = vld [vmem:[#allocation2 + $0x398] sm:$0xff]
    %v170 = vld [vmem:[#allocation2 + $0x3a0] sm:$0xff]
    %v171 = vld [vmem:[#allocation2 + $0x3a8] sm:$0xff]
    %v172 = vld [vmem:[#allocation2 + $0x3b0] sm:$0xff]
    %v173 = vld [vmem:[#allocation2 + $0x3b8] sm:$0xff]
    %v174 = vld [vmem:[#allocation2 + $0x3c0] sm:$0xff]
    %v175 = vld [vmem:[#allocation2 + $0x3c8] sm:$0xff]
    %v176 = vld [vmem:[#allocation2 + $0x3d0] sm:$0xff]
    %v177 = vld [vmem:[#allocation2 + $0x3d8] sm:$0xff]
    %v178 = vld [vmem:[#allocation2 + $0x3e0] sm:$0xff]
    %v179 = vld [vmem:[#allocation2 + $0x3e8] sm:$0xff]
    %v180 = vld [vmem:[#allocation2 + $0x3f0] sm:$0xff]
    %v181 = vld [vmem:[#allocation2 + $0x3f8] sm:$0xff]
    %v182 = vld [vmem:[%s2] sm:$0xf]
    %v184 = vperm.slane %v182, 0
    %v185 = vperm.slane %v182, 1
    %v186 = vperm.slane %v182, 2
    %v187 = vperm.slane %v182, 3
    %v194 = vunpack.c.l.b16 %v52
    %v195 = vunpack.c.h.b16 %v52
    %v196 = vunpack.c.l.b16 %v53
    %v197 = vunpack.c.h.b16 %v53
    %v198 = vpack.c.b16 %v194, %v194
    %v199 = vpack.c.b16 %v195, %v195
    %v200 = vpack.c.b16 %v196, %v196
    %v201 = vpack.c.b16 %v197, %v197
    %v334 = vunpack.c.l.b16 %v54
    %v335 = vunpack.c.h.b16 %v54
    %v336 = vunpack.c.l.b16 %v55
    %v337 = vunpack.c.h.b16 %v55
    %v338 = vunpack.c.l.b16 %v56
    %v339 = vunpack.c.h.b16 %v56
    %v340 = vunpack.c.l.b16 %v57
    %v341 = vunpack.c.h.b16 %v57
    %v342 = vunpack.c.l.b16 %v58
    %v343 = vunpack.c.h.b16 %v58
    %v344 = vunpack.c.l.b16 %v59
    %v345 = vunpack.c.h.b16 %v59
    %v346 = vunpack.c.l.b16 %v60
    %v347 = vunpack.c.h.b16 %v60
    %v348 = vunpack.c.l.b16 %v61
    %v349 = vunpack.c.h.b16 %v61
    %v350 = vunpack.c.l.b16 %v62
    %v351 = vunpack.c.h.b16 %v62
    %v352 = vunpack.c.l.b16 %v63
    %v353 = vunpack.c.h.b16 %v63
    %v354 = vunpack.c.l.b16 %v64
    %v355 = vunpack.c.h.b16 %v64
    %v356 = vunpack.c.l.b16 %v65
    %v357 = vunpack.c.h.b16 %v65
    %v358 = vunpack.c.l.b16 %v66
    %v359 = vunpack.c.h.b16 %v66
    %v360 = vunpack.c.l.b16 %v67
    %v361 = vunpack.c.h.b16 %v67
    %v362 = vunpack.c.l.b16 %v68
    %v363 = vunpack.c.h.b16 %v68
    %v364 = vunpack.c.l.b16 %v69
    %v365 = vunpack.c.h.b16 %v69
    %v366 = vunpack.c.l.b16 %v70
    %v367 = vunpack.c.h.b16 %v70
    %v368 = vunpack.c.l.b16 %v71
    %v369 = vunpack.c.h.b16 %v71
    %v370 = vunpack.c.l.b16 %v72
    %v371 = vunpack.c.h.b16 %v72
    %v372 = vunpack.c.l.b16 %v73
    %v373 = vunpack.c.h.b16 %v73
    %v374 = vunpack.c.l.b16 %v74
    %v375 = vunpack.c.h.b16 %v74
    %v376 = vunpack.c.l.b16 %v75
    %v377 = vunpack.c.h.b16 %v75
    %v378 = vunpack.c.l.b16 %v76
    %v379 = vunpack.c.h.b16 %v76
    %v380 = vunpack.c.l.b16 %v77
    %v381 = vunpack.c.h.b16 %v77
    %v382 = vunpack.c.l.b16 %v78
    %v383 = vunpack.c.h.b16 %v78
    %v384 = vunpack.c.l.b16 %v79
    %v385 = vunpack.c.h.b16 %v79
    %v386 = vunpack.c.l.b16 %v80
    %v387 = vunpack.c.h.b16 %v80
    %v388 = vunpack.c.l.b16 %v81
    %v389 = vunpack.c.h.b16 %v81
    %v390 = vunpack.c.l.b16 %v82
    %v391 = vunpack.c.h.b16 %v82
    %v392 = vunpack.c.l.b16 %v83
    %v393 = vunpack.c.h.b16 %v83
    %v394 = vunpack.c.l.b16 %v84
    %v395 = vunpack.c.h.b16 %v84
    %v396 = vunpack.c.l.b16 %v85
    %v397 = vunpack.c.h.b16 %v85
    %v398 = vunpack.c.l.b16 %v86
    %v399 = vunpack.c.h.b16 %v86
    %v400 = vunpack.c.l.b16 %v87
    %v401 = vunpack.c.h.b16 %v87
    %v402 = vunpack.c.l.b16 %v88
    %v403 = vunpack.c.h.b16 %v88
    %v404 = vunpack.c.l.b16 %v89
    %v405 = vunpack.c.h.b16 %v89
    %v406 = vunpack.c.l.b16 %v90
    %v407 = vunpack.c.h.b16 %v90
    %v408 = vunpack.c.l.b16 %v91
    %v409 = vunpack.c.h.b16 %v91
    %v410 = vunpack.c.l.b16 %v92
    %v411 = vunpack.c.h.b16 %v92
    %v412 = vunpack.c.l.b16 %v93
    %v413 = vunpack.c.h.b16 %v93
    %v414 = vunpack.c.l.b16 %v94
    %v415 = vunpack.c.h.b16 %v94
    %v416 = vunpack.c.l.b16 %v95
    %v417 = vunpack.c.h.b16 %v95
    %v418 = vunpack.c.l.b16 %v96
    %v419 = vunpack.c.h.b16 %v96
    %v420 = vunpack.c.l.b16 %v97
    %v421 = vunpack.c.h.b16 %v97
    %v422 = vunpack.c.l.b16 %v98
    %v423 = vunpack.c.h.b16 %v98
    %v424 = vunpack.c.l.b16 %v99
    %v425 = vunpack.c.h.b16 %v99
    %v426 = vunpack.c.l.b16 %v100
    %v427 = vunpack.c.h.b16 %v100
    %v428 = vunpack.c.l.b16 %v101
    %v429 = vunpack.c.h.b16 %v101
    %v430 = vunpack.c.l.b16 %v102
    %v431 = vunpack.c.h.b16 %v102
    %v432 = vunpack.c.l.b16 %v103
    %v433 = vunpack.c.h.b16 %v103
    %v434 = vunpack.c.l.b16 %v104
    %v435 = vunpack.c.h.b16 %v104
    %v436 = vunpack.c.l.b16 %v105
    %v437 = vunpack.c.h.b16 %v105
    %v438 = vunpack.c.l.b16 %v106
    %v439 = vunpack.c.h.b16 %v106
    %v440 = vunpack.c.l.b16 %v107
    %v441 = vunpack.c.h.b16 %v107
    %v442 = vunpack.c.l.b16 %v108
    %v443 = vunpack.c.h.b16 %v108
    %v444 = vunpack.c.l.b16 %v109
    %v445 = vunpack.c.h.b16 %v109
    %v446 = vunpack.c.l.b16 %v110
    %v447 = vunpack.c.h.b16 %v110
    %v448 = vunpack.c.l.b16 %v111
    %v449 = vunpack.c.h.b16 %v111
    %v450 = vunpack.c.l.b16 %v112
    %v451 = vunpack.c.h.b16 %v112
    %v452 = vunpack.c.l.b16 %v113
    %v453 = vunpack.c.h.b16 %v113
    %v454 = vunpack.c.l.b16 %v114
    %v455 = vunpack.c.h.b16 %v114
    %v456 = vunpack.c.l.b16 %v115
    %v457 = vunpack.c.h.b16 %v115
    %v458 = vunpack.c.l.b16 %v116
    %v459 = vunpack.c.h.b16 %v116
    %v460 = vunpack.c.l.b16 %v117
    %v461 = vunpack.c.h.b16 %v117
    %v462 = vunpack.c.l.b16 %v118
    %v463 = vunpack.c.h.b16 %v118
    %v464 = vunpack.c.l.b16 %v119
    %v465 = vunpack.c.h.b16 %v119
    %v466 = vunpack.c.l.b16 %v120
    %v467 = vunpack.c.h.b16 %v120
    %v468 = vunpack.c.l.b16 %v121
    %v469 = vunpack.c.h.b16 %v121
    %v470 = vunpack.c.l.b16 %v122
    %v471 = vunpack.c.h.b16 %v122
    %v472 = vunpack.c.l.b16 %v123
    %v473 = vunpack.c.h.b16 %v123
    %v474 = vunpack.c.l.b16 %v124
    %v475 = vunpack.c.h.b16 %v124
    %v476 = vunpack.c.l.b16 %v125
    %v477 = vunpack.c.h.b16 %v125
    %v478 = vunpack.c.l.b16 %v126
    %v479 = vunpack.c.h.b16 %v126
    %v480 = vunpack.c.l.b16 %v127
    %v481 = vunpack.c.h.b16 %v127
    %v482 = vunpack.c.l.b16 %v128
    %v483 = vunpack.c.h.b16 %v128
    %v484 = vunpack.c.l.b16 %v129
    %v485 = vunpack.c.h.b16 %v129
    %v486 = vunpack.c.l.b16 %v130
    %v487 = vunpack.c.h.b16 %v130
    %v488 = vunpack.c.l.b16 %v131
    %v489 = vunpack.c.h.b16 %v131
    %v490 = vunpack.c.l.b16 %v132
    %v491 = vunpack.c.h.b16 %v132
    %v492 = vunpack.c.l.b16 %v133
    %v493 = vunpack.c.h.b16 %v133
    %v494 = vunpack.c.l.b16 %v134
    %v495 = vunpack.c.h.b16 %v134
    %v496 = vunpack.c.l.b16 %v135
    %v497 = vunpack.c.h.b16 %v135
    %v498 = vunpack.c.l.b16 %v136
    %v499 = vunpack.c.h.b16 %v136
    %v500 = vunpack.c.l.b16 %v137
    %v501 = vunpack.c.h.b16 %v137
    %v502 = vunpack.c.l.b16 %v138
    %v503 = vunpack.c.h.b16 %v138
    %v504 = vunpack.c.l.b16 %v139
    %v505 = vunpack.c.h.b16 %v139
    %v506 = vunpack.c.l.b16 %v140
    %v507 = vunpack.c.h.b16 %v140
    %v508 = vunpack.c.l.b16 %v141
    %v509 = vunpack.c.h.b16 %v141
    %v510 = vunpack.c.l.b16 %v142
    %v511 = vunpack.c.h.b16 %v142
    %v512 = vunpack.c.l.b16 %v143
    %v513 = vunpack.c.h.b16 %v143
    %v514 = vunpack.c.l.b16 %v144
    %v515 = vunpack.c.h.b16 %v144
    %v516 = vunpack.c.l.b16 %v145
    %v517 = vunpack.c.h.b16 %v145
    %v518 = vunpack.c.l.b16 %v146
    %v519 = vunpack.c.h.b16 %v146
    %v520 = vunpack.c.l.b16 %v147
    %v521 = vunpack.c.h.b16 %v147
    %v522 = vunpack.c.l.b16 %v148
    %v523 = vunpack.c.h.b16 %v148
    %v524 = vunpack.c.l.b16 %v149
    %v525 = vunpack.c.h.b16 %v149
    %v526 = vunpack.c.l.b16 %v150
    %v527 = vunpack.c.h.b16 %v150
    %v528 = vunpack.c.l.b16 %v151
    %v529 = vunpack.c.h.b16 %v151
    %v530 = vunpack.c.l.b16 %v152
    %v531 = vunpack.c.h.b16 %v152
    %v532 = vunpack.c.l.b16 %v153
    %v533 = vunpack.c.h.b16 %v153
    %v534 = vunpack.c.l.b16 %v154
    %v535 = vunpack.c.h.b16 %v154
    %v536 = vunpack.c.l.b16 %v155
    %v537 = vunpack.c.h.b16 %v155
    %v538 = vunpack.c.l.b16 %v156
    %v539 = vunpack.c.h.b16 %v156
    %v540 = vunpack.c.l.b16 %v157
    %v541 = vunpack.c.h.b16 %v157
    %v542 = vunpack.c.l.b16 %v158
    %v543 = vunpack.c.h.b16 %v158
    %v544 = vunpack.c.l.b16 %v159
    %v545 = vunpack.c.h.b16 %v159
    %v546 = vunpack.c.l.b16 %v160
    %v547 = vunpack.c.h.b16 %v160
    %v548 = vunpack.c.l.b16 %v161
    %v549 = vunpack.c.h.b16 %v161
    %v550 = vunpack.c.l.b16 %v162
    %v551 = vunpack.c.h.b16 %v162
    %v552 = vunpack.c.l.b16 %v163
    %v553 = vunpack.c.h.b16 %v163
    %v554 = vunpack.c.l.b16 %v164
    %v555 = vunpack.c.h.b16 %v164
    %v556 = vunpack.c.l.b16 %v165
    %v557 = vunpack.c.h.b16 %v165
    %v558 = vunpack.c.l.b16 %v166
    %v559 = vunpack.c.h.b16 %v166
    %v560 = vunpack.c.l.b16 %v167
    %v561 = vunpack.c.h.b16 %v167
    %v562 = vunpack.c.l.b16 %v168
    %v563 = vunpack.c.h.b16 %v168
    %v564 = vunpack.c.l.b16 %v169
    %v565 = vunpack.c.h.b16 %v169
    %v566 = vunpack.c.l.b16 %v170
    %v567 = vunpack.c.h.b16 %v170
    %v568 = vunpack.c.l.b16 %v171
    %v569 = vunpack.c.h.b16 %v171
    %v570 = vunpack.c.l.b16 %v172
    %v571 = vunpack.c.h.b16 %v172
    %v572 = vunpack.c.l.b16 %v173
    %v573 = vunpack.c.h.b16 %v173
    %v574 = vunpack.c.l.b16 %v174
    %v575 = vunpack.c.h.b16 %v174
    %v576 = vunpack.c.l.b16 %v175
    %v577 = vunpack.c.h.b16 %v175
    %v578 = vunpack.c.l.b16 %v176
    %v579 = vunpack.c.h.b16 %v176
    %v580 = vunpack.c.l.b16 %v177
    %v581 = vunpack.c.h.b16 %v177
    %v582 = vunpack.c.l.b16 %v178
    %v583 = vunpack.c.h.b16 %v178
    %v584 = vunpack.c.l.b16 %v179
    %v585 = vunpack.c.h.b16 %v179
    %v586 = vunpack.c.l.b16 %v180
    %v587 = vunpack.c.h.b16 %v180
    %v588 = vunpack.c.l.b16 %v181
    %v589 = vunpack.c.h.b16 %v181
    %v590 = vpack.c.b16 %v338, %v334
    %v591 = vpack.c.b16 %v339, %v335
    %v592 = vpack.c.b16 %v340, %v336
    %v593 = vpack.c.b16 %v341, %v337
    %v594 = vpack.c.b16 %v346, %v342
    %v595 = vpack.c.b16 %v347, %v343
    %v596 = vpack.c.b16 %v348, %v344
    %v597 = vpack.c.b16 %v349, %v345
    %v598 = vpack.c.b16 %v354, %v350
    %v599 = vpack.c.b16 %v355, %v351
    %v600 = vpack.c.b16 %v356, %v352
    %v601 = vpack.c.b16 %v357, %v353
    %v602 = vpack.c.b16 %v362, %v358
    %v603 = vpack.c.b16 %v363, %v359
    %v604 = vpack.c.b16 %v364, %v360
    %v605 = vpack.c.b16 %v365, %v361
    %v606 = vpack.c.b16 %v370, %v366
    %v607 = vpack.c.b16 %v371, %v367
    %v608 = vpack.c.b16 %v372, %v368
    %v609 = vpack.c.b16 %v373, %v369
    %v610 = vpack.c.b16 %v378, %v374
    %v611 = vpack.c.b16 %v379, %v375
    %v612 = vpack.c.b16 %v380, %v376
    %v613 = vpack.c.b16 %v381, %v377
    %v614 = vpack.c.b16 %v386, %v382
    %v615 = vpack.c.b16 %v387, %v383
    %v616 = vpack.c.b16 %v388, %v384
    %v617 = vpack.c.b16 %v389, %v385
    %v618 = vpack.c.b16 %v394, %v390
    %v619 = vpack.c.b16 %v395, %v391
    %v620 = vpack.c.b16 %v396, %v392
    %v621 = vpack.c.b16 %v397, %v393
    %v622 = vpack.c.b16 %v402, %v398
    %v623 = vpack.c.b16 %v403, %v399
    %v624 = vpack.c.b16 %v404, %v400
    %v625 = vpack.c.b16 %v405, %v401
    %v626 = vpack.c.b16 %v410, %v406
    %v627 = vpack.c.b16 %v411, %v407
    %v628 = vpack.c.b16 %v412, %v408
    %v629 = vpack.c.b16 %v413, %v409
    %v630 = vpack.c.b16 %v418, %v414
    %v631 = vpack.c.b16 %v419, %v415
    %v632 = vpack.c.b16 %v420, %v416
    %v633 = vpack.c.b16 %v421, %v417
    %v634 = vpack.c.b16 %v426, %v422
    %v635 = vpack.c.b16 %v427, %v423
    %v636 = vpack.c.b16 %v428, %v424
    %v637 = vpack.c.b16 %v429, %v425
    %v638 = vpack.c.b16 %v434, %v430
    %v639 = vpack.c.b16 %v435, %v431
    %v640 = vpack.c.b16 %v436, %v432
    %v641 = vpack.c.b16 %v437, %v433
    %v642 = vpack.c.b16 %v442, %v438
    %v643 = vpack.c.b16 %v443, %v439
    %v644 = vpack.c.b16 %v444, %v440
    %v645 = vpack.c.b16 %v445, %v441
    %v646 = vpack.c.b16 %v450, %v446
    %v647 = vpack.c.b16 %v451, %v447
    %v648 = vpack.c.b16 %v452, %v448
    %v649 = vpack.c.b16 %v453, %v449
    %v650 = vpack.c.b16 %v458, %v454
    %v651 = vpack.c.b16 %v459, %v455
    %v652 = vpack.c.b16 %v460, %v456
    %v653 = vpack.c.b16 %v461, %v457
    %v654 = vpack.c.b16 %v466, %v462
    %v655 = vpack.c.b16 %v467, %v463
    %v656 = vpack.c.b16 %v468, %v464
    %v657 = vpack.c.b16 %v469, %v465
    %v658 = vpack.c.b16 %v474, %v470
    %v659 = vpack.c.b16 %v475, %v471
    %v660 = vpack.c.b16 %v476, %v472
    %v661 = vpack.c.b16 %v477, %v473
    %v662 = vpack.c.b16 %v482, %v478
    %v663 = vpack.c.b16 %v483, %v479
    %v664 = vpack.c.b16 %v484, %v480
    %v665 = vpack.c.b16 %v485, %v481
    %v666 = vpack.c.b16 %v490, %v486
    %v667 = vpack.c.b16 %v491, %v487
    %v668 = vpack.c.b16 %v492, %v488
    %v669 = vpack.c.b16 %v493, %v489
    %v670 = vpack.c.b16 %v498, %v494
    %v671 = vpack.c.b16 %v499, %v495
    %v672 = vpack.c.b16 %v500, %v496
    %v673 = vpack.c.b16 %v501, %v497
    %v674 = vpack.c.b16 %v506, %v502
    %v675 = vpack.c.b16 %v507, %v503
    %v676 = vpack.c.b16 %v508, %v504
    %v677 = vpack.c.b16 %v509, %v505
    %v678 = vpack.c.b16 %v514, %v510
    %v679 = vpack.c.b16 %v515, %v511
    %v680 = vpack.c.b16 %v516, %v512
    %v681 = vpack.c.b16 %v517, %v513
    %v682 = vpack.c.b16 %v522, %v518
    %v683 = vpack.c.b16 %v523, %v519
    %v684 = vpack.c.b16 %v524, %v520
    %v685 = vpack.c.b16 %v525, %v521
    %v686 = vpack.c.b16 %v530, %v526
    %v687 = vpack.c.b16 %v531, %v527
    %v688 = vpack.c.b16 %v532, %v528
    %v689 = vpack.c.b16 %v533, %v529
    %v690 = vpack.c.b16 %v538, %v534
    %v691 = vpack.c.b16 %v539, %v535
    %v692 = vpack.c.b16 %v540, %v536
    %v693 = vpack.c.b16 %v541, %v537
    %v694 = vpack.c.b16 %v546, %v542
    %v695 = vpack.c.b16 %v547, %v543
    %v696 = vpack.c.b16 %v548, %v544
    %v697 = vpack.c.b16 %v549, %v545
    %v698 = vpack.c.b16 %v554, %v550
    %v699 = vpack.c.b16 %v555, %v551
    %v700 = vpack.c.b16 %v556, %v552
    %v701 = vpack.c.b16 %v557, %v553
    %v702 = vpack.c.b16 %v562, %v558
    %v703 = vpack.c.b16 %v563, %v559
    %v704 = vpack.c.b16 %v564, %v560
    %v705 = vpack.c.b16 %v565, %v561
    %v706 = vpack.c.b16 %v570, %v566
    %v707 = vpack.c.b16 %v571, %v567
    %v708 = vpack.c.b16 %v572, %v568
    %v709 = vpack.c.b16 %v573, %v569
    %v710 = vpack.c.b16 %v578, %v574
    %v711 = vpack.c.b16 %v579, %v575
    %v712 = vpack.c.b16 %v580, %v576
    %v713 = vpack.c.b16 %v581, %v577
    %v714 = vpack.c.b16 %v586, %v582
    %v715 = vpack.c.b16 %v587, %v583
    %v716 = vpack.c.b16 %v588, %v584
    %v717 = vpack.c.b16 %v589, %v585
    %846 = vmatpush.bf16.msra.mxu0 %v618
    %847 = vmatpush.bf16.msra.mxu0 %v614
    %848 = vmatpush.bf16.msra.mxu0 %v610
    %849 = vmatpush.bf16.msra.mxu0 %v606
    %850 = vmatpush.bf16.msra.mxu0 %v602
    %851 = vmatpush.bf16.msra.mxu0 %v598
    %852 = vmatpush.bf16.msra.mxu0 %v594
    %853 = vmatpush.bf16.msra.mxu0 %v590
    %854 = vmatmul.bf16.gmra.mxu0 %v198
    %v855 = vpop.f32.mrf.mxu0
    %v856 = vadd.f32 %v184, %v855
    %v857 = vpop.f32.mrf.mxu0
    %858 = vdwg.mxu0
    %859 = vmatpush.bf16.msra.mxu0 %v650
    %860 = vmatpush.bf16.msra.mxu0 %v646
    %861 = vmatpush.bf16.msra.mxu0 %v642
    %862 = vmatpush.bf16.msra.mxu0 %v638
    %863 = vmatpush.bf16.msra.mxu0 %v634
    %864 = vmatpush.bf16.msra.mxu0 %v630
    %865 = vmatpush.bf16.msra.mxu0 %v626
    %866 = vmatpush.bf16.msra.mxu0 %v622
    %867 = vmatmul.bf16.gmra.mxu0 %v199
    %v868 = vpop.f32.mrf.mxu0
    %v869 = vadd.f32 %v856, %v868
    %v870 = vpop.f32.mrf.mxu0
    %871 = vdwg.mxu0
    %872 = vmatpush.bf16.msra.mxu0 %v682
    %873 = vmatpush.bf16.msra.mxu0 %v678
    %874 = vmatpush.bf16.msra.mxu0 %v674
    %875 = vmatpush.bf16.msra.mxu0 %v670
    %876 = vmatpush.bf16.msra.mxu0 %v666
    %877 = vmatpush.bf16.msra.mxu0 %v662
    %878 = vmatpush.bf16.msra.mxu0 %v658
    %879 = vmatpush.bf16.msra.mxu0 %v654
    %880 = vmatmul.bf16.gmra.mxu0 %v200
    %v881 = vpop.f32.mrf.mxu0
    %v882 = vadd.f32 %v869, %v881
    %v883 = vpop.f32.mrf.mxu0
    %884 = vdwg.mxu0
    %885 = vmatpush.bf16.msra.mxu0 %v714
    %886 = vmatpush.bf16.msra.mxu0 %v710
    %887 = vmatpush.bf16.msra.mxu0 %v706
    %888 = vmatpush.bf16.msra.mxu0 %v702
    %889 = vmatpush.bf16.msra.mxu0 %v698
    %890 = vmatpush.bf16.msra.mxu0 %v694
    %891 = vmatpush.bf16.msra.mxu0 %v690
    %892 = vmatpush.bf16.msra.mxu0 %v686
    %893 = vmatmul.bf16.gmra.mxu0 %v201
    %v894 = vpop.f32.mrf.mxu0
    %v895 = vadd.f32 %v882, %v894
    %v896 = vpop.f32.mrf.mxu0
    %897 = vdwg.mxu0
    %898 = vmatpush.bf16.msra.mxu0 %v619
    %899 = vmatpush.bf16.msra.mxu0 %v615
    %900 = vmatpush.bf16.msra.mxu0 %v611
    %901 = vmatpush.bf16.msra.mxu0 %v607
    %902 = vmatpush.bf16.msra.mxu0 %v603
    %903 = vmatpush.bf16.msra.mxu0 %v599
    %904 = vmatpush.bf16.msra.mxu0 %v595
    %905 = vmatpush.bf16.msra.mxu0 %v591
    %906 = vmatmul.bf16.gmra.mxu0 %v198
    %v907 = vpop.f32.mrf.mxu0
    %v908 = vadd.f32 %v185, %v907
    %v909 = vpop.f32.mrf.mxu0
    %910 = vdwg.mxu0
    %911 = vmatpush.bf16.msra.mxu0 %v651
    %912 = vmatpush.bf16.msra.mxu0 %v647
    %913 = vmatpush.bf16.msra.mxu0 %v643
    %914 = vmatpush.bf16.msra.mxu0 %v639
    %915 = vmatpush.bf16.msra.mxu0 %v635
    %916 = vmatpush.bf16.msra.mxu0 %v631
    %917 = vmatpush.bf16.msra.mxu0 %v627
    %918 = vmatpush.bf16.msra.mxu0 %v623
    %919 = vmatmul.bf16.gmra.mxu0 %v199
    %v920 = vpop.f32.mrf.mxu0
    %v921 = vadd.f32 %v908, %v920
    %v922 = vpop.f32.mrf.mxu0
    %923 = vdwg.mxu0
    %924 = vmatpush.bf16.msra.mxu0 %v683
    %925 = vmatpush.bf16.msra.mxu0 %v679
    %926 = vmatpush.bf16.msra.mxu0 %v675
    %927 = vmatpush.bf16.msra.mxu0 %v671
    %928 = vmatpush.bf16.msra.mxu0 %v667
    %929 = vmatpush.bf16.msra.mxu0 %v663
    %930 = vmatpush.bf16.msra.mxu0 %v659
    %931 = vmatpush.bf16.msra.mxu0 %v655
    %932 = vmatmul.bf16.gmra.mxu0 %v200
    %v933 = vpop.f32.mrf.mxu0
    %v934 = vadd.f32 %v921, %v933
    %v935 = vpop.f32.mrf.mxu0
    %936 = vdwg.mxu0
    %937 = vmatpush.bf16.msra.mxu0 %v715
    %938 = vmatpush.bf16.msra.mxu0 %v711
    %939 = vmatpush.bf16.msra.mxu0 %v707
    %940 = vmatpush.bf16.msra.mxu0 %v703
    %941 = vmatpush.bf16.msra.mxu0 %v699
    %942 = vmatpush.bf16.msra.mxu0 %v695
    %943 = vmatpush.bf16.msra.mxu0 %v691
    %944 = vmatpush.bf16.msra.mxu0 %v687
    %945 = vmatmul.bf16.gmra.mxu0 %v201
    %v946 = vpop.f32.mrf.mxu0
    %v947 = vadd.f32 %v934, %v946
    %v948 = vpop.f32.mrf.mxu0
    %949 = vdwg.mxu0
    %950 = vmatpush.bf16.msra.mxu0 %v620
    %951 = vmatpush.bf16.msra.mxu0 %v616
    %952 = vmatpush.bf16.msra.mxu0 %v612
    %953 = vmatpush.bf16.msra.mxu0 %v608
    %954 = vmatpush.bf16.msra.mxu0 %v604
    %955 = vmatpush.bf16.msra.mxu0 %v600
    %956 = vmatpush.bf16.msra.mxu0 %v596
    %957 = vmatpush.bf16.msra.mxu0 %v592
    %958 = vmatmul.bf16.gmra.mxu0 %v198
    %v959 = vpop.f32.mrf.mxu0
    %v960 = vadd.f32 %v186, %v959
    %v961 = vpop.f32.mrf.mxu0
    %962 = vdwg.mxu0
    %963 = vmatpush.bf16.msra.mxu0 %v652
    %964 = vmatpush.bf16.msra.mxu0 %v648
    %965 = vmatpush.bf16.msra.mxu0 %v644
    %966 = vmatpush.bf16.msra.mxu0 %v640
    %967 = vmatpush.bf16.msra.mxu0 %v636
    %968 = vmatpush.bf16.msra.mxu0 %v632
    %969 = vmatpush.bf16.msra.mxu0 %v628
    %970 = vmatpush.bf16.msra.mxu0 %v624
    %971 = vmatmul.bf16.gmra.mxu0 %v199
    %v972 = vpop.f32.mrf.mxu0
    %v973 = vadd.f32 %v960, %v972
    %v974 = vpop.f32.mrf.mxu0
    %975 = vdwg.mxu0
    %976 = vmatpush.bf16.msra.mxu0 %v684
    %977 = vmatpush.bf16.msra.mxu0 %v680
    %978 = vmatpush.bf16.msra.mxu0 %v676
    %979 = vmatpush.bf16.msra.mxu0 %v672
    %980 = vmatpush.bf16.msra.mxu0 %v668
    %981 = vmatpush.bf16.msra.mxu0 %v664
    %982 = vmatpush.bf16.msra.mxu0 %v660
    %983 = vmatpush.bf16.msra.mxu0 %v656
    %984 = vmatmul.bf16.gmra.mxu0 %v200
    %v985 = vpop.f32.mrf.mxu0
    %v986 = vadd.f32 %v973, %v985
    %v987 = vpop.f32.mrf.mxu0
    %988 = vdwg.mxu0
    %989 = vmatpush.bf16.msra.mxu0 %v716
    %990 = vmatpush.bf16.msra.mxu0 %v712
    %991 = vmatpush.bf16.msra.mxu0 %v708
    %992 = vmatpush.bf16.msra.mxu0 %v704
    %993 = vmatpush.bf16.msra.mxu0 %v700
    %994 = vmatpush.bf16.msra.mxu0 %v696
    %995 = vmatpush.bf16.msra.mxu0 %v692
    %996 = vmatpush.bf16.msra.mxu0 %v688
    %997 = vmatmul.bf16.gmra.mxu0 %v201
    %v998 = vpop.f32.mrf.mxu0
    %v999 = vadd.f32 %v986, %v998
    %v1000 = vpop.f32.mrf.mxu0
    %1001 = vdwg.mxu0
    %1002 = vmatpush.bf16.msra.mxu0 %v621
    %1003 = vmatpush.bf16.msra.mxu0 %v617
    %1004 = vmatpush.bf16.msra.mxu0 %v613
    %1005 = vmatpush.bf16.msra.mxu0 %v609
    %1006 = vmatpush.bf16.msra.mxu0 %v605
    %1007 = vmatpush.bf16.msra.mxu0 %v601
    %1008 = vmatpush.bf16.msra.mxu0 %v597
    %1009 = vmatpush.bf16.msra.mxu0 %v593
    %1010 = vmatmul.bf16.gmra.mxu0 %v198
    %v1011 = vpop.f32.mrf.mxu0
    %v1012 = vadd.f32 %v187, %v1011
    %v1013 = vpop.f32.mrf.mxu0
    %1014 = vdwg.mxu0
    %1015 = vmatpush.bf16.msra.mxu0 %v653
    %1016 = vmatpush.bf16.msra.mxu0 %v649
    %1017 = vmatpush.bf16.msra.mxu0 %v645
    %1018 = vmatpush.bf16.msra.mxu0 %v641
    %1019 = vmatpush.bf16.msra.mxu0 %v637
    %1020 = vmatpush.bf16.msra.mxu0 %v633
    %1021 = vmatpush.bf16.msra.mxu0 %v629
    %1022 = vmatpush.bf16.msra.mxu0 %v625
    %1023 = vmatmul.bf16.gmra.mxu0 %v199
    %v1024 = vpop.f32.mrf.mxu0
    %v1025 = vadd.f32 %v1012, %v1024
    %v1026 = vpop.f32.mrf.mxu0
    %1027 = vdwg.mxu0
    %1028 = vmatpush.bf16.msra.mxu0 %v685
    %1029 = vmatpush.bf16.msra.mxu0 %v681
    %1030 = vmatpush.bf16.msra.mxu0 %v677
    %1031 = vmatpush.bf16.msra.mxu0 %v673
    %1032 = vmatpush.bf16.msra.mxu0 %v669
    %1033 = vmatpush.bf16.msra.mxu0 %v665
    %1034 = vmatpush.bf16.msra.mxu0 %v661
    %1035 = vmatpush.bf16.msra.mxu0 %v657
    %1036 = vmatmul.bf16.gmra.mxu0 %v200
    %v1037 = vpop.f32.mrf.mxu0
    %v1038 = vadd.f32 %v1025, %v1037
    %v1039 = vpop.f32.mrf.mxu0
    %1040 = vdwg.mxu0
    %1041 = vmatpush.bf16.msra.mxu0 %v717
    %1042 = vmatpush.bf16.msra.mxu0 %v713
    %1043 = vmatpush.bf16.msra.mxu0 %v709
    %1044 = vmatpush.bf16.msra.mxu0 %v705
    %1045 = vmatpush.bf16.msra.mxu0 %v701
    %1046 = vmatpush.bf16.msra.mxu0 %v697
    %1047 = vmatpush.bf16.msra.mxu0 %v693
    %1048 = vmatpush.bf16.msra.mxu0 %v689
    %1049 = vmatmul.bf16.gmra.mxu0 %v201
    %v1050 = vpop.f32.mrf.mxu0
    %v1051 = vadd.f32 %v1038, %v1050
    %v1052 = vpop.f32.mrf.mxu0
    %1053 = vdwg.mxu0
    %v1054 = vmax.f32 %v895, 0.0
    %v1055 = vmax.f32 %v947, 0.0
    %v1056 = vmax.f32 %v999, 0.0
    %v1057 = vmax.f32 %v1051, 0.0
    %v1058 = vpack.c.bf16 %v1054, %v1054
    %v1059 = vpack.c.bf16 %v1055, %v1055
    %v1060 = vpack.c.bf16 %v1056, %v1056
    %v1061 = vpack.c.bf16 %v1057, %v1057
    %v1062 = vld [vmem:[#allocation4] sm:$0xf]
    %v1063 = vld [vmem:[#allocation4 + $0x4] sm:$0xf]
    %v1064 = vld [vmem:[#allocation4 + $0x8] sm:$0xf]
    %v1065 = vld [vmem:[#allocation4 + $0xc] sm:$0xf]
    %v1066 = vld [vmem:[#allocation4 + $0x10] sm:$0xf]
    %v1067 = vld [vmem:[#allocation4 + $0x14] sm:$0xf]
    %v1068 = vld [vmem:[#allocation4 + $0x18] sm:$0xf]
    %v1069 = vld [vmem:[#allocation4 + $0x1c] sm:$0xf]
    %v1070 = vld [vmem:[#allocation4 + $0x20] sm:$0xf]
    %v1071 = vld [vmem:[#allocation4 + $0x24] sm:$0xf]
    %v1072 = vld [vmem:[#allocation4 + $0x28] sm:$0xf]
    %v1073 = vld [vmem:[#allocation4 + $0x2c] sm:$0xf]
    %v1074 = vld [vmem:[#allocation4 + $0x30] sm:$0xf]
    %v1075 = vld [vmem:[#allocation4 + $0x34] sm:$0xf]
    %v1076 = vld [vmem:[#allocation4 + $0x38] sm:$0xf]
    %v1077 = vld [vmem:[#allocation4 + $0x3c] sm:$0xf]
    %v1078 = vld [vmem:[#allocation4 + $0x40] sm:$0xf]
    %v1079 = vld [vmem:[#allocation4 + $0x44] sm:$0xf]
    %v1080 = vld [vmem:[#allocation4 + $0x48] sm:$0xf]
    %v1081 = vld [vmem:[#allocation4 + $0x4c] sm:$0xf]
    %v1082 = vld [vmem:[#allocation4 + $0x50] sm:$0xf]
    %v1083 = vld [vmem:[#allocation4 + $0x54] sm:$0xf]
    %v1084 = vld [vmem:[#allocation4 + $0x58] sm:$0xf]
    %v1085 = vld [vmem:[#allocation4 + $0x5c] sm:$0xf]
    %v1086 = vld [vmem:[#allocation4 + $0x60] sm:$0xf]
    %v1087 = vld [vmem:[#allocation4 + $0x64] sm:$0xf]
    %v1088 = vld [vmem:[#allocation4 + $0x68] sm:$0xf]
    %v1089 = vld [vmem:[#allocation4 + $0x6c] sm:$0xf]
    %v1090 = vld [vmem:[#allocation4 + $0x70] sm:$0xf]
    %v1091 = vld [vmem:[#allocation4 + $0x74] sm:$0xf]
    %v1092 = vld [vmem:[#allocation4 + $0x78] sm:$0xf]
    %v1093 = vld [vmem:[#allocation4 + $0x7c] sm:$0xf]
    %v1094 = vld [vmem:[#allocation4 + $0x80] sm:$0xf]
    %v1095 = vld [vmem:[#allocation4 + $0x84] sm:$0xf]
    %v1096 = vld [vmem:[#allocation4 + $0x88] sm:$0xf]
    %v1097 = vld [vmem:[#allocation4 + $0x8c] sm:$0xf]
    %v1098 = vld [vmem:[#allocation4 + $0x90] sm:$0xf]
    %v1099 = vld [vmem:[#allocation4 + $0x94] sm:$0xf]
    %v1100 = vld [vmem:[#allocation4 + $0x98] sm:$0xf]
    %v1101 = vld [vmem:[#allocation4 + $0x9c] sm:$0xf]
    %v1102 = vld [vmem:[#allocation4 + $0xa0] sm:$0xf]
    %v1103 = vld [vmem:[#allocation4 + $0xa4] sm:$0xf]
    %v1104 = vld [vmem:[#allocation4 + $0xa8] sm:$0xf]
    %v1105 = vld [vmem:[#allocation4 + $0xac] sm:$0xf]
    %v1106 = vld [vmem:[#allocation4 + $0xb0] sm:$0xf]
    %v1107 = vld [vmem:[#allocation4 + $0xb4] sm:$0xf]
    %v1108 = vld [vmem:[#allocation4 + $0xb8] sm:$0xf]
    %v1109 = vld [vmem:[#allocation4 + $0xbc] sm:$0xf]
    %v1110 = vld [vmem:[#allocation4 + $0xc0] sm:$0xf]
    %v1111 = vld [vmem:[#allocation4 + $0xc4] sm:$0xf]
    %v1112 = vld [vmem:[#allocation4 + $0xc8] sm:$0xf]
    %v1113 = vld [vmem:[#allocation4 + $0xcc] sm:$0xf]
    %v1114 = vld [vmem:[#allocation4 + $0xd0] sm:$0xf]
    %v1115 = vld [vmem:[#allocation4 + $0xd4] sm:$0xf]
    %v1116 = vld [vmem:[#allocation4 + $0xd8] sm:$0xf]
    %v1117 = vld [vmem:[#allocation4 + $0xdc] sm:$0xf]
    %v1118 = vld [vmem:[#allocation4 + $0xe0] sm:$0xf]
    %v1119 = vld [vmem:[#allocation4 + $0xe4] sm:$0xf]
    %v1120 = vld [vmem:[#allocation4 + $0xe8] sm:$0xf]
    %v1121 = vld [vmem:[#allocation4 + $0xec] sm:$0xf]
    %v1122 = vld [vmem:[#allocation4 + $0xf0] sm:$0xf]
    %v1123 = vld [vmem:[#allocation4 + $0xf4] sm:$0xf]
    %v1124 = vld [vmem:[#allocation4 + $0xf8] sm:$0xf]
    %v1125 = vld [vmem:[#allocation4 + $0xfc] sm:$0xf]
    %v1126 = vld [vmem:[%s4] sm:$0x1]
    %v1128 = vperm.slane %v1126, 0
    %v1194 = vunpack.c.l.b16 %v1062
    %v1195 = vunpack.c.l.b16 %v1063
    %v1196 = vunpack.c.l.b16 %v1064
    %v1197 = vunpack.c.l.b16 %v1065
    %v1198 = vunpack.c.l.b16 %v1066
    %v1199 = vunpack.c.l.b16 %v1067
    %v1200 = vunpack.c.l.b16 %v1068
    %v1201 = vunpack.c.l.b16 %v1069
    %v1202 = vunpack.c.l.b16 %v1070
    %v1203 = vunpack.c.l.b16 %v1071
    %v1204 = vunpack.c.l.b16 %v1072
    %v1205 = vunpack.c.l.b16 %v1073
    %v1206 = vunpack.c.l.b16 %v1074
    %v1207 = vunpack.c.l.b16 %v1075
    %v1208 = vunpack.c.l.b16 %v1076
    %v1209 = vunpack.c.l.b16 %v1077
    %v1210 = vunpack.c.l.b16 %v1078
    %v1211 = vunpack.c.l.b16 %v1079
    %v1212 = vunpack.c.l.b16 %v1080
    %v1213 = vunpack.c.l.b16 %v1081
    %v1214 = vunpack.c.l.b16 %v1082
    %v1215 = vunpack.c.l.b16 %v1083
    %v1216 = vunpack.c.l.b16 %v1084
    %v1217 = vunpack.c.l.b16 %v1085
    %v1218 = vunpack.c.l.b16 %v1086
    %v1219 = vunpack.c.l.b16 %v1087
    %v1220 = vunpack.c.l.b16 %v1088
    %v1221 = vunpack.c.l.b16 %v1089
    %v1222 = vunpack.c.l.b16 %v1090
    %v1223 = vunpack.c.l.b16 %v1091
    %v1224 = vunpack.c.l.b16 %v1092
    %v1225 = vunpack.c.l.b16 %v1093
    %v1226 = vunpack.c.l.b16 %v1094
    %v1227 = vunpack.c.l.b16 %v1095
    %v1228 = vunpack.c.l.b16 %v1096
    %v1229 = vunpack.c.l.b16 %v1097
    %v1230 = vunpack.c.l.b16 %v1098
    %v1231 = vunpack.c.l.b16 %v1099
    %v1232 = vunpack.c.l.b16 %v1100
    %v1233 = vunpack.c.l.b16 %v1101
    %v1234 = vunpack.c.l.b16 %v1102
    %v1235 = vunpack.c.l.b16 %v1103
    %v1236 = vunpack.c.l.b16 %v1104
    %v1237 = vunpack.c.l.b16 %v1105
    %v1238 = vunpack.c.l.b16 %v1106
    %v1239 = vunpack.c.l.b16 %v1107
    %v1240 = vunpack.c.l.b16 %v1108
    %v1241 = vunpack.c.l.b16 %v1109
    %v1242 = vunpack.c.l.b16 %v1110
    %v1243 = vunpack.c.l.b16 %v1111
    %v1244 = vunpack.c.l.b16 %v1112
    %v1245 = vunpack.c.l.b16 %v1113
    %v1246 = vunpack.c.l.b16 %v1114
    %v1247 = vunpack.c.l.b16 %v1115
    %v1248 = vunpack.c.l.b16 %v1116
    %v1249 = vunpack.c.l.b16 %v1117
    %v1250 = vunpack.c.l.b16 %v1118
    %v1251 = vunpack.c.l.b16 %v1119
    %v1252 = vunpack.c.l.b16 %v1120
    %v1253 = vunpack.c.l.b16 %v1121
    %v1254 = vunpack.c.l.b16 %v1122
    %v1255 = vunpack.c.l.b16 %v1123
    %v1256 = vunpack.c.l.b16 %v1124
    %v1257 = vunpack.c.l.b16 %v1125
    %v1258 = vpack.c.b16 %v1195, %v1194
    %v1259 = vpack.c.b16 %v1197, %v1196
    %v1260 = vpack.c.b16 %v1199, %v1198
    %v1261 = vpack.c.b16 %v1201, %v1200
    %v1262 = vpack.c.b16 %v1203, %v1202
    %v1263 = vpack.c.b16 %v1205, %v1204
    %v1264 = vpack.c.b16 %v1207, %v1206
    %v1265 = vpack.c.b16 %v1209, %v1208
    %v1266 = vpack.c.b16 %v1211, %v1210
    %v1267 = vpack.c.b16 %v1213, %v1212
    %v1268 = vpack.c.b16 %v1215, %v1214
    %v1269 = vpack.c.b16 %v1217, %v1216
    %v1270 = vpack.c.b16 %v1219, %v1218
    %v1271 = vpack.c.b16 %v1221, %v1220
    %v1272 = vpack.c.b16 %v1223, %v1222
    %v1273 = vpack.c.b16 %v1225, %v1224
    %v1274 = vpack.c.b16 %v1227, %v1226
    %v1275 = vpack.c.b16 %v1229, %v1228
    %v1276 = vpack.c.b16 %v1231, %v1230
    %v1277 = vpack.c.b16 %v1233, %v1232
    %v1278 = vpack.c.b16 %v1235, %v1234
    %v1279 = vpack.c.b16 %v1237, %v1236
    %v1280 = vpack.c.b16 %v1239, %v1238
    %v1281 = vpack.c.b16 %v1241, %v1240
    %v1282 = vpack.c.b16 %v1243, %v1242
    %v1283 = vpack.c.b16 %v1245, %v1244
    %v1284 = vpack.c.b16 %v1247, %v1246
    %v1285 = vpack.c.b16 %v1249, %v1248
    %v1286 = vpack.c.b16 %v1251, %v1250
    %v1287 = vpack.c.b16 %v1253, %v1252
    %v1288 = vpack.c.b16 %v1255, %v1254
    %v1289 = vpack.c.b16 %v1257, %v1256
    %1322 = vmatpush.bf16.msra.mxu0 %v1265
    %1323 = vmatpush.bf16.msra.mxu0 %v1264
    %1324 = vmatpush.bf16.msra.mxu0 %v1263
    %1325 = vmatpush.bf16.msra.mxu0 %v1262
    %1326 = vmatpush.bf16.msra.mxu0 %v1261
    %1327 = vmatpush.bf16.msra.mxu0 %v1260
    %1328 = vmatpush.bf16.msra.mxu0 %v1259
    %1329 = vmatpush.bf16.msra.mxu0 %v1258
    %1330 = vmatmul.bf16.gmra.mxu0 %v1058
    %v1331 = vpop.f32.mrf.mxu0
    %v1332 = vadd.f32 %v1128, %v1331
    %v1333 = vpop.f32.mrf.mxu0
    %1334 = vdwg.mxu0
    %1335 = vmatpush.bf16.msra.mxu0 %v1273
    %1336 = vmatpush.bf16.msra.mxu0 %v1272
    %1337 = vmatpush.bf16.msra.mxu0 %v1271
    %1338 = vmatpush.bf16.msra.mxu0 %v1270
    %1339 = vmatpush.bf16.msra.mxu0 %v1269
    %1340 = vmatpush.bf16.msra.mxu0 %v1268
    %1341 = vmatpush.bf16.msra.mxu0 %v1267
    %1342 = vmatpush.bf16.msra.mxu0 %v1266
    %1343 = vmatmul.bf16.gmra.mxu0 %v1059
    %v1344 = vpop.f32.mrf.mxu0
    %v1345 = vadd.f32 %v1332, %v1344
    %v1346 = vpop.f32.mrf.mxu0
    %1347 = vdwg.mxu0
    %1348 = vmatpush.bf16.msra.mxu0 %v1281
    %1349 = vmatpush.bf16.msra.mxu0 %v1280
    %1350 = vmatpush.bf16.msra.mxu0 %v1279
    %1351 = vmatpush.bf16.msra.mxu0 %v1278
    %1352 = vmatpush.bf16.msra.mxu0 %v1277
    %1353 = vmatpush.bf16.msra.mxu0 %v1276
    %1354 = vmatpush.bf16.msra.mxu0 %v1275
    %1355 = vmatpush.bf16.msra.mxu0 %v1274
    %1356 = vmatmul.bf16.gmra.mxu0 %v1060
    %v1357 = vpop.f32.mrf.mxu0
    %v1358 = vadd.f32 %v1345, %v1357
    %v1359 = vpop.f32.mrf.mxu0
    %1360 = vdwg.mxu0
    %1361 = vmatpush.bf16.msra.mxu0 %v1289
    %1362 = vmatpush.bf16.msra.mxu0 %v1288
    %1363 = vmatpush.bf16.msra.mxu0 %v1287
    %1364 = vmatpush.bf16.msra.mxu0 %v1286
    %1365 = vmatpush.bf16.msra.mxu0 %v1285
    %1366 = vmatpush.bf16.msra.mxu0 %v1284
    %1367 = vmatpush.bf16.msra.mxu0 %v1283
    %1368 = vmatpush.bf16.msra.mxu0 %v1282
    %1369 = vmatmul.bf16.gmra.mxu0 %v1061
    %v1370 = vpop.f32.mrf.mxu0
    %v1371 = vadd.f32 %v1358, %v1370
    %v1372 = vpop.f32.mrf.mxu0
    %1373 = vdwg.mxu0
    %v1374 = vpack.c.bf16 %v1371, %v1371
    %1375 = vst [vmem:[%s5] sm:$0xf] %v1374
    // Predicated region
    $region30: #{discriminator_forward.1} parent=1 // pred_check
      _
    $region31: #{discriminator_forward.1} parent=1 // pred_check_branch
      %1377 = sbr.rel (0) target = $region33
    $region32: #{discriminator_forward.1} parent=1 // pred_region
      _
    $region33: #{discriminator_forward.1} parent=1 // pred_fallthru
      _
    // Predicated region
    $region34: #{discriminator_forward.1} parent=1 // pred_check
      _
    $region35: #{discriminator_forward.1} parent=1 // pred_check_branch
      %1379 = sbr.rel (0) target = $region37
    $region36: #{discriminator_forward.1} parent=1 // pred_region
      _
    $region37: #{discriminator_forward.1} parent=1 // pred_fallthru
      _
    %1380 = vsyncpa [#allocation3], 1
    %1381 = vsyncpa [#allocation5], 1

</llo_original>
